<compile_context>
chip_gen: v6e
topology: v6e:2x2x1
jax: 0.10.0
libtpu: 0.0.40
codegen_flags: <defaults>
</compile_context>

<pallas_src>
import functools

import numpy as np
import jax
import jax.numpy as jnp
from jax import lax
from jax.experimental import pallas as pl
from jax.experimental.pallas import tpu as pltpu


# ----------------------------------------------------------------------------
# Fused kernel: 1x1 conv (+BN) -> head-batched affine -> tanh lattice -> tent
# bilinear splat onto a TxT grid via one MXU matmul per head (lane-dense,
# transposed accumulation).  Grid: (batch, N-chunk); the z output block is
# resident across the N-chunk axis and used as the accumulator.
# ----------------------------------------------------------------------------
def _fused_pool_kernel(x_ref, w_ref, b_ref, abd_ref, astk_ref, t_ref, pcd_ref,
                       z_ref, keys_ref, *, heads, feat_dim, tensor_size,
                       n_tile, n_valid):
    T = tensor_size
    F = feat_dim
    H = heads
    nc = pl.program_id(1)

    @pl.when(nc == 0)
    def _init():
        z_ref[...] = jnp.zeros_like(z_ref)

    # 1x1 conv with BN scale pre-folded into w; bf16 operands, f32 accumulate.
    kv = jnp.dot(w_ref[...], x_ref[0], preferred_element_type=jnp.float32)
    kv = kv + b_ref[...]                                              # (O, NT) f32

    # Head-batched per-head affine 3D -> 2D:
    #   keys[2h+d] = sum_j A[h,d,j] * (pcd[j] + kv_keys[3h+j]) + t[h,d]
    # realized as a block-diagonal (2H,3H) matmul + a stacked (2H,3) matmul on pcd.
    keys_all = (jnp.dot(abd_ref[...], kv[:3 * H],
                        preferred_element_type=jnp.float32)
                + jnp.dot(astk_ref[...], pcd_ref[0],
                          preferred_element_type=jnp.float32)
                + t_ref[...])                                         # (2H, NT) f32
    keys_ref[0] = keys_all                                            # one dense slab store

    # DifferentiablePositions: tanh lattice -> continuous grid position in [0, T-1].
    pos = (jnp.tanh(keys_all) + 1.0) * (0.5 * (T - 1))                # (2H, NT)

    # Tent (hat) bilinear weights for all heads & both axes at once:
    #   w_all[c, r, n] = max(0, 1 - |r - pos[c, n]|)   (identical to floor/clip bilinear)
    r_iota = lax.broadcasted_iota(jnp.int32, (1, T, n_tile), 1).astype(jnp.float32)
    w_all = jnp.maximum(0.0, 1.0 - jnp.abs(r_iota - pos[:, None, :]))
    w_all = w_all.reshape(2 * H * T, n_tile).astype(jnp.bfloat16)     # (2H*T, NT) bf16

    vals = kv[3 * H:]                                                 # (H*F, NT) f32
    if n_valid is not None:
        # Mask columns past the true N (padding added in the wrapper).
        col = nc * n_tile + lax.broadcasted_iota(jnp.int32, (1, n_tile), 1)
        vals = jnp.where(col < n_valid, vals, 0.0)
    vals = vals.astype(jnp.bfloat16)                                  # (H*F, NT) bf16

    for h in range(H):          # heads is small & static; splat-only work per head
        wr = w_all[2 * h * T:(2 * h + 1) * T]                         # (T, NT) row wts
        wc = w_all[(2 * h + 1) * T:(2 * h + 2) * T]                   # (T, NT) col wts
        v_h = vals[h * F:(h + 1) * F]                                 # (F, NT)
        # tmp[f*T + c, n] = v[f, n] * wc[c, n]   (bf16 VPU broadcast-mul)
        tmp = (v_h[:, None, :] * wc[None, :, :]).reshape(F * T, n_tile)
        # Lane-dense transposed splat: z_h[r, f*T + c] = sum_n wr[r,n] * tmp[f*T+c, n]
        z_h = lax.dot_general(wr, tmp, (((1,), (1,)), ((), ())),
                              preferred_element_type=jnp.float32)     # (T, F*T) f32
        z_ref[0, h * T:(h + 1) * T, :] += z_h


def _round_up(n, m):
    return ((n + m - 1) // m) * m


def _fold_bn(params, eps=1e-5):
    """Fold eval-mode BatchNorm: scale into the conv weights (exact), bias kept."""
    key_scale = params["key_bn_gamma"] / jnp.sqrt(params["key_bn_var"] + eps)
    key_bias = params["key_bn_beta"] - key_scale * params["key_bn_mean"]
    val_scale = params["val_bn_gamma"] / jnp.sqrt(params["val_bn_var"] + eps)
    val_bias = params["val_bn_beta"] - val_scale * params["val_bn_mean"]
    scale = jnp.concatenate([key_scale, val_scale])
    bias = jnp.concatenate([key_bias, val_bias]).astype(jnp.float32)
    w_eff = (scale[:, None] * params["w_kv"]).astype(jnp.float32)
    return w_eff, bias


# ----------------------------------------------------------------------------
# Full MultiHeadPool forward.
# ----------------------------------------------------------------------------
def multi_head_pool_forward(params, x, orig_pcd, *, heads, in_feature_dim,
                            tensor_size, tensor_dim, return_lattice=False):
    assert tensor_dim == 2  # TODO(synk): tensor_dim == 3 not implemented.
    B, C, N = x.shape
    H, F, T = heads, in_feature_dim, tensor_size
    O = H * (F + 3)

    w_eff, bias = _fold_bn(params)
    w_bf16 = w_eff.astype(jnp.bfloat16)                    # bf16 MXU operand
    bias2d = bias[:, None]                                 # (O, 1) f32

    # Per-head affine params -> block-diagonal / stacked forms for head-batched matmuls.
    A = params["A"].astype(jnp.float32)                    # (H, 2, 3)
    t = params["t"].astype(jnp.float32)                    # (H, 2, 1)
    eye = jnp.eye(H, dtype=jnp.float32)
    A_bd = (A[:, :, None, :] * eye[:, None, :, None]).reshape(2 * H, 3 * H)
    A_stack = A.reshape(2 * H, 3)
    t_col = t.reshape(2 * H, 1)

    # Pad N to a 128-multiple and pick a bounded lane-aligned tile (masked in-kernel).
    N_pad = _round_up(N, 128)
    NT = 512
    if N_pad < NT:
        NT = N_pad
    else:
        while N_pad % NT:
            NT //= 2                                       # 512 -> 256 -> 128
    n_chunks = N_pad // NT
    n_valid = None if N_pad == N else N

    x_p = x if N_pad == N else jnp.pad(x, ((0, 0), (0, 0), (0, N_pad - N)))
    pcd_p = orig_pcd if N_pad == N else jnp.pad(orig_pcd, ((0, 0), (0, 0), (0, N_pad - N)))
    x_b = x_p.astype(jnp.bfloat16)
    pcd_f = pcd_p.astype(jnp.float32)

    kern = functools.partial(_fused_pool_kernel, heads=H, feat_dim=F,
                             tensor_size=T, n_tile=NT, n_valid=n_valid)
    z, keys = pl.pallas_call(
        kern,
        out_shape=(
            jax.ShapeDtypeStruct((B, H * T, F * T), jnp.float32),   # lane-dense z^T
            jax.ShapeDtypeStruct((B, 2 * H, N_pad), jnp.float32),   # keys slab
        ),
        grid_spec=pltpu.PrefetchScalarGridSpec(
            num_scalar_prefetch=0,
            grid=(B, n_chunks),
            in_specs=[
                pl.BlockSpec((1, C, NT), lambda b, nc: (b, 0, nc)),    # x (bf16)
                pl.BlockSpec((O, C), lambda b, nc: (0, 0)),            # w (bf16, BN folded)
                pl.BlockSpec((O, 1), lambda b, nc: (0, 0)),            # bias (f32)
                pl.BlockSpec((2 * H, 3 * H), lambda b, nc: (0, 0)),    # A block-diagonal
                pl.BlockSpec((2 * H, 3), lambda b, nc: (0, 0)),        # A stacked (pcd term)
                pl.BlockSpec((2 * H, 1), lambda b, nc: (0, 0)),        # t
                pl.BlockSpec((1, 3, NT), lambda b, nc: (b, 0, nc)),    # orig_pcd (f32)
            ],
            out_specs=[
                # z block is resident across the N-chunk axis -> in-VMEM accumulator.
                pl.BlockSpec((1, H * T, F * T), lambda b, nc: (b, 0, 0)),
                pl.BlockSpec((1, 2 * H, NT), lambda b, nc: (b, 0, nc)),
            ],
        ),
        compiler_params=pltpu.CompilerParams(
            dimension_semantics=("parallel", "arbitrary"),
            vmem_limit_bytes=48 * 1024 * 1024),
    )(x_b, w_bf16, bias2d, A_bd, A_stack, t_col, pcd_f)

    # Regroup the transposed/lane-dense kernel layout back to (B, H*F, T, T); z is small.
    z_out = z.reshape(B, H, T, F, T).transpose(0, 1, 3, 2, 4).reshape(B, H * F, T, T)
    keys_flat = keys[:, :, :N]

    occ = (jnp.abs(z_out) > 1e-9).sum().astype(jnp.float32) / (B * F * H)
    stats = (occ, jnp.mean(keys_flat), jnp.var(keys_flat, ddof=1), None)

    result = z_out
    if return_lattice:
        result = (result, jnp.tanh(keys_flat))
    return result, stats


# ----------------------------------------------------------------------------
# Pure-JAX reference (numerical sanity check).  Takes the BN-folded, bf16-rounded
# conv operands so the comparison is quantization-matched to the kernel (the kernel
# uses bf16 MXU operands with f32 accumulation).
# ----------------------------------------------------------------------------
def _reference_forward(w_eff, bias, A, t, x, orig_pcd, heads, F, T):
    B, _, N = x.shape
    kv = jnp.einsum("oc,bcn->bon", w_eff, x,
                    precision=lax.Precision.HIGHEST) + bias[None, :, None]
    keys_res = kv[:, :heads * 3].reshape(B, heads, 3, N)
    values = kv[:, heads * 3:].reshape(B, heads, F, N)
    pts = orig_pcd[:, None] + keys_res                                # (B,H,3,N)
    keys = jnp.einsum("hij,bhjn->bhin", A, pts,
                      precision=lax.Precision.HIGHEST) + t[None]
    lattice = jnp.tanh(keys)
    pos = jnp.clip((lattice + 1.0) * 0.5 * (T - 1), 0.0, float(T - 1))
    f = jnp.clip(jnp.floor(pos), 0.0, float(T - 2))
    lc = pos - f
    fi = f.astype(jnp.int32)
    zf = jnp.zeros((B, heads, F, T * T), jnp.float32)
    bi = jnp.arange(B)[:, None, None, None]
    hi = jnp.arange(heads)[None, :, None, None]
    ci = jnp.arange(F)[None, None, :, None]
    for d0 in (0, 1):
        w0 = lc[:, :, 0, :] if d0 else 1.0 - lc[:, :, 0, :]
        for d1 in (0, 1):
            w1 = lc[:, :, 1, :] if d1 else 1.0 - lc[:, :, 1, :]
            idx = (fi[:, :, 0, :] + d0) * T + (fi[:, :, 1, :] + d1)   # (B,H,N)
            contrib = values * (w0 * w1)[:, :, None, :]               # (B,H,F,N)
            zf = zf.at[bi, hi, ci, idx[:, :, None, :]].add(contrib)
    return zf.reshape(B, heads * F, T, T), keys


if __name__ == "__main__":
    # Small shapes consistent with the module.
    B, model_dim, N = 2, 32, 16
    heads, in_feature_dim, tensor_size, tensor_dim = 2, 4, 8, 2
    O = heads * (in_feature_dim + 3)

    key = jax.random.PRNGKey(0)
    ks = jax.random.split(key, 12)

    # NOTE: the original _reset_parameters zeroes key_bn.weight; a small nonzero
    # value is used here so the key path is numerically exercised.  BN means/vars
    # are nonzero/non-unit so the BN fold is fully exercised.
    params = {
        "w_kv": jax.random.normal(ks[0], (O, model_dim), jnp.float32) / np.sqrt(model_dim),
        "key_bn_gamma": 0.1 * jnp.ones((heads * 3,), jnp.float32),
        "key_bn_beta": 0.05 * jax.random.normal(ks[5], (heads * 3,), jnp.float32),
        "key_bn_mean": 0.1 * jax.random.normal(ks[6], (heads * 3,), jnp.float32),
        "key_bn_var": 1.0 + 0.1 * jax.random.uniform(ks[7], (heads * 3,), jnp.float32),
        "val_bn_gamma": jnp.ones((heads * in_feature_dim,), jnp.float32),
        "val_bn_beta": jnp.zeros((heads * in_feature_dim,), jnp.float32),
        "val_bn_mean": 0.1 * jax.random.normal(ks[8], (heads * in_feature_dim,), jnp.float32),
        "val_bn_var": 1.0 + 0.1 * jax.random.uniform(ks[9], (heads * in_feature_dim,), jnp.float32),
        # Per-head affine 3D->2D transform (stand-in for PlaneTransformer).
        "A": 0.5 * jax.random.normal(ks[1], (heads, 2, 3), jnp.float32),
        "t": 0.1 * jax.random.normal(ks[2], (heads, 2, 1), jnp.float32),
    }

    x = jax.random.normal(ks[3], (B, model_dim, N), jnp.float32)
    orig_pcd = jax.random.normal(ks[4], (B, 3, N), jnp.float32)

    (z_out, lattice), stats = multi_head_pool_forward(
        params, x, orig_pcd, heads=heads, in_feature_dim=in_feature_dim,
        tensor_size=tensor_size, tensor_dim=tensor_dim, return_lattice=True)
    z_out = jax.block_until_ready(z_out)
    lattice = jax.block_until_ready(lattice)
    occ, keys_mean, keys_var = jax.block_until_ready(stats[:3])

    # --- sanity checks against the quantization-matched pure-JAX reference ---
    w_eff, bias = _fold_bn(params)
    w_q = w_eff.astype(jnp.bfloat16).astype(jnp.float32)
    x_q = x.astype(jnp.bfloat16).astype(jnp.float32)
    z_ref, keys_ref = _reference_forward(w_q, bias, params["A"], params["t"],
                                         x_q, orig_pcd, heads, in_feature_dim, tensor_size)
    lattice_ref = jnp.tanh(keys_ref.reshape(B, heads * tensor_dim, N))

    np.testing.assert_allclose(np.asarray(lattice), np.asarray(lattice_ref),
                               rtol=5e-2, atol=5e-2)
    np.testing.assert_allclose(np.asarray(z_out), np.asarray(z_ref),
                               rtol=5e-2, atol=5e-2)

    assert z_out.shape == (B, heads * in_feature_dim, tensor_size, tensor_size)
    assert np.isfinite(np.asarray(occ)) and np.isfinite(np.asarray(keys_mean))
    assert np.isfinite(np.asarray(keys_var))
    print("KERNEL_OK")
</pallas_src>

<mosaic_0001>
module attributes {stable_mosaic.version = 11 : i64} {
  func.func @_fused_pool_kernel(%arg0: i32, %arg1: i32, %arg2: memref<1x32x128xbf16, #tpu.memory_space<vmem>>, %arg3: memref<14x32xbf16, #tpu.memory_space<vmem>>, %arg4: memref<14x1xf32, #tpu.memory_space<vmem>>, %arg5: memref<4x6xf32, #tpu.memory_space<vmem>>, %arg6: memref<4x3xf32, #tpu.memory_space<vmem>>, %arg7: memref<4x1xf32, #tpu.memory_space<vmem>>, %arg8: memref<1x3x128xf32, #tpu.memory_space<vmem>>, %arg9: memref<1x16x32xf32, #tpu.memory_space<vmem>>, %arg10: memref<1x4x128xf32, #tpu.memory_space<vmem>>) attributes {dimension_semantics = [#tpu.dimension_semantics<parallel>, #tpu.dimension_semantics<arbitrary>], iteration_bounds = array<i64: 2, 1>, scalar_prefetch = 0 : i64, scratch_operands = 0 : i64, tpu.core_type = #tpu.core_type<tc>, window_params = [{transform_indices = @transform_0, window_bounds = array<i64: 1, 32, 128>}, {pipeline_mode = #tpu.pipeline_mode<synchronous>, transform_indices = @transform_1, window_bounds = array<i64: 14, 32>}, {pipeline_mode = #tpu.pipeline_mode<synchronous>, transform_indices = @transform_2, window_bounds = array<i64: 14, 1>}, {pipeline_mode = #tpu.pipeline_mode<synchronous>, transform_indices = @transform_3, window_bounds = array<i64: 4, 6>}, {pipeline_mode = #tpu.pipeline_mode<synchronous>, transform_indices = @transform_4, window_bounds = array<i64: 4, 3>}, {pipeline_mode = #tpu.pipeline_mode<synchronous>, transform_indices = @transform_5, window_bounds = array<i64: 4, 1>}, {transform_indices = @transform_6, window_bounds = array<i64: 1, 3, 128>}, {transform_indices = @transform_7, window_bounds = array<i64: 1, 16, 32>}, {transform_indices = @transform_8, window_bounds = array<i64: 1, 4, 128>}]} {
    %c0_i32 = arith.constant 0 : i32
    %0 = arith.cmpi eq, %arg1, %c0_i32 : i32
    %1 = arith.extui %0 : i1 to i32
    %c0_i32_0 = arith.constant 0 : i32
    %2 = arith.cmpi ne, %1, %c0_i32_0 : i32
    scf.if %2 {
      %cst_39 = arith.constant 0.000000e+00 : f32
      %86 = vector.broadcast %cst_39 : f32 to vector<1x16x32xf32>
      %c0_40 = arith.constant 0 : index
      %c0_41 = arith.constant 0 : index
      %c0_42 = arith.constant 0 : index
      %87 = vector.load %arg9[%c0_40, %c0_41, %c0_42] : memref<1x16x32xf32, #tpu.memory_space<vmem>>, vector<1x16x32xf32>
      tpu.vector_store %arg9[%c0_40, %c0_41, %c0_42], %86 {strides = array<i32>} : memref<1x16x32xf32, #tpu.memory_space<vmem>>, vector<1x16x32xf32>,
    } else {
    }
    %c0 = arith.constant 0 : index
    %c0_1 = arith.constant 0 : index
    %3 = vector.load %arg3[%c0, %c0_1] : memref<14x32xbf16, #tpu.memory_space<vmem>>, vector<14x32xbf16>
    %c0_2 = arith.constant 0 : index
    %c0_3 = arith.constant 0 : index
    %c0_4 = arith.constant 0 : index
    %4 = vector.load %arg2[%c0_2, %c0_3, %c0_4] : memref<1x32x128xbf16, #tpu.memory_space<vmem>>, vector<1x32x128xbf16>
    %5 = vector.shape_cast %4 : vector<1x32x128xbf16> to vector<32x128xbf16>
    %cst = arith.constant dense<0.000000e+00> : vector<14x128xf32>
    %6 = tpu.matmul %3, %5, %cst {dimension_numbers = #tpu.dot_dimension_numbers<[1], [0], [0], [1], [0, 0, 1, 1], [], []>} : vector<14x32xbf16>, vector<32x128xbf16>, vector<14x128xf32> -> vector<14x128xf32>
    %c0_5 = arith.constant 0 : index
    %c0_6 = arith.constant 0 : index
    %7 = vector.load %arg4[%c0_5, %c0_6] : memref<14x1xf32, #tpu.memory_space<vmem>>, vector<14x1xf32>
    %8 = vector.broadcast %7 : vector<14x1xf32> to vector<14x128xf32>
    %9 = arith.addf %6, %8 : vector<14x128xf32>
    %c0_7 = arith.constant 0 : index
    %c0_8 = arith.constant 0 : index
    %10 = vector.load %arg5[%c0_7, %c0_8] : memref<4x6xf32, #tpu.memory_space<vmem>>, vector<4x6xf32>
    %11 = vector.extract_strided_slice %9 {offsets = [0, 0], sizes = [6, 128], strides = [1, 1]} : vector<14x128xf32> to vector<6x128xf32>
    %cst_9 = arith.constant dense<0.000000e+00> : vector<4x128xf32>
    %12 = tpu.matmul %10, %11, %cst_9 {dimension_numbers = #tpu.dot_dimension_numbers<[1], [0], [0], [1], [0, 0, 1, 1], [], []>} : vector<4x6xf32>, vector<6x128xf32>, vector<4x128xf32> -> vector<4x128xf32>
    %c0_10 = arith.constant 0 : index
    %c0_11 = arith.constant 0 : index
    %13 = vector.load %arg6[%c0_10, %c0_11] : memref<4x3xf32, #tpu.memory_space<vmem>>, vector<4x3xf32>
    %c0_12 = arith.constant 0 : index
    %c0_13 = arith.constant 0 : index
    %c0_14 = arith.constant 0 : index
    %14 = vector.load %arg8[%c0_12, %c0_13, %c0_14] : memref<1x3x128xf32, #tpu.memory_space<vmem>>, vector<1x3x128xf32>
    %15 = vector.shape_cast %14 : vector<1x3x128xf32> to vector<3x128xf32>
    %cst_15 = arith.constant dense<0.000000e+00> : vector<4x128xf32>
    %16 = tpu.matmul %13, %15, %cst_15 {dimension_numbers = #tpu.dot_dimension_numbers<[1], [0], [0], [1], [0, 0, 1, 1], [], []>} : vector<4x3xf32>, vector<3x128xf32>, vector<4x128xf32> -> vector<4x128xf32>
    %17 = arith.addf %12, %16 : vector<4x128xf32>
    %c0_16 = arith.constant 0 : index
    %c0_17 = arith.constant 0 : index
    %18 = vector.load %arg7[%c0_16, %c0_17] : memref<4x1xf32, #tpu.memory_space<vmem>>, vector<4x1xf32>
    %19 = vector.broadcast %18 : vector<4x1xf32> to vector<4x128xf32>
    %20 = arith.addf %17, %19 : vector<4x128xf32>
    %c0_18 = arith.constant 0 : index
    %c0_19 = arith.constant 0 : index
    %c0_20 = arith.constant 0 : index
    %21 = vector.load %arg10[%c0_18, %c0_19, %c0_20] : memref<1x4x128xf32, #tpu.memory_space<vmem>>, vector<1x4x128xf32>
    %22 = vector.shape_cast %21 : vector<1x4x128xf32> to vector<4x128xf32>
    %23 = vector.shape_cast %20 : vector<4x128xf32> to vector<1x4x128xf32>
    tpu.vector_store %arg10[%c0_18, %c0_19, %c0_20], %23 {strides = array<i32>} : memref<1x4x128xf32, #tpu.memory_space<vmem>>, vector<1x4x128xf32>,
    %24 = math.tanh %20 : vector<4x128xf32>
    %cst_21 = arith.constant 1.000000e+00 : f32
    %25 = vector.broadcast %cst_21 : f32 to vector<4x128xf32>
    %26 = arith.addf %24, %25 : vector<4x128xf32>
    %cst_22 = arith.constant 3.500000e+00 : f32
    %27 = vector.broadcast %cst_22 : f32 to vector<4x128xf32>
    %28 = arith.mulf %26, %27 : vector<4x128xf32>
    %29 = tpu.iota {dimensions = array<i32: 1>} : vector<1x8x128xi32>
    %30 = arith.sitofp %29 : vector<1x8x128xi32> to vector<1x8x128xf32>
    %31 = vector.shape_cast %28 : vector<4x128xf32> to vector<4x1x128xf32>
    %32 = vector.broadcast %30 : vector<1x8x128xf32> to vector<4x8x128xf32>
    %33 = vector.broadcast %31 : vector<4x1x128xf32> to vector<4x8x128xf32>
    %34 = arith.subf %32, %33 : vector<4x8x128xf32>
    %35 = math.absf %34 : vector<4x8x128xf32>
    %cst_23 = arith.constant 1.000000e+00 : f32
    %36 = vector.broadcast %cst_23 : f32 to vector<4x8x128xf32>
    %37 = arith.subf %36, %35 : vector<4x8x128xf32>
    %cst_24 = arith.constant 0.000000e+00 : f32
    %38 = vector.broadcast %cst_24 : f32 to vector<4x8x128xf32>
    %39 = arith.maximumf %38, %37 : vector<4x8x128xf32>
    %40 = vector.shape_cast %39 : vector<4x8x128xf32> to vector<32x128xf32>
    %41 = arith.truncf %40 : vector<32x128xf32> to vector<32x128xbf16>
    %42 = vector.extract_strided_slice %9 {offsets = [6, 0], sizes = [8, 128], strides = [1, 1]} : vector<14x128xf32> to vector<8x128xf32>
    %c128_i32 = arith.constant 128 : i32
    %43 = arith.muli %arg1, %c128_i32 : i32
    %44 = tpu.iota {dimensions = array<i32: 1>} : vector<1x128xi32>
    %45 = vector.broadcast %43 : i32 to vector<1x128xi32>
    %46 = arith.addi %45, %44 : vector<1x128xi32>
    %c16_i32 = arith.constant 16 : i32
    %47 = vector.broadcast %c16_i32 : i32 to vector<1x128xi32>
    %48 = arith.cmpi slt, %46, %47 : vector<1x128xi32>
    %cst_25 = arith.constant 0.000000e+00 : f32
    %49 = vector.shape_cast %48 : vector<1x128xi1> to vector<1x128xi1>
    %50 = vector.broadcast %49 : vector<1x128xi1> to vector<8x128xi1>
    %51 = vector.broadcast %cst_25 : f32 to vector<8x128xf32>
    %52 = arith.select %50, %42, %51 : vector<8x128xi1>, vector<8x128xf32>
    %53 = arith.truncf %52 : vector<8x128xf32> to vector<8x128xbf16>
    %54 = vector.extract_strided_slice %41 {offsets = [0, 0], sizes = [8, 128], strides = [1, 1]} : vector<32x128xbf16> to vector<8x128xbf16>
    %55 = vector.extract_strided_slice %41 {offsets = [8, 0], sizes = [8, 128], strides = [1, 1]} : vector<32x128xbf16> to vector<8x128xbf16>
    %56 = vector.extract_strided_slice %53 {offsets = [0, 0], sizes = [4, 128], strides = [1, 1]} : vector<8x128xbf16> to vector<4x128xbf16>
    %57 = vector.shape_cast %56 : vector<4x128xbf16> to vector<4x1x128xbf16>
    %58 = vector.shape_cast %55 : vector<8x128xbf16> to vector<1x8x128xbf16>
    %59 = vector.broadcast %57 : vector<4x1x128xbf16> to vector<4x8x128xbf16>
    %60 = vector.broadcast %58 : vector<1x8x128xbf16> to vector<4x8x128xbf16>
    %61 = arith.mulf %59, %60 : vector<4x8x128xbf16>
    %62 = vector.shape_cast %61 : vector<4x8x128xbf16> to vector<32x128xbf16>
    %cst_26 = arith.constant dense<0.000000e+00> : vector<8x32xf32>
    %63 = tpu.matmul %54, %62, %cst_26 {dimension_numbers = #tpu.dot_dimension_numbers<[1], [1], [0], [0], [0, 0, 1, 0], [], []>} : vector<8x128xbf16>, vector<32x128xbf16>, vector<8x32xf32> -> vector<8x32xf32>
    %c0_27 = arith.constant 0 : index
    %c0_28 = arith.constant 0 : index
    %c0_29 = arith.constant 0 : index
    %64 = vector.load %arg9[%c0_27, %c0_28, %c0_29] : memref<1x16x32xf32, #tpu.memory_space<vmem>>, vector<1x8x32xf32>
    %65 = vector.shape_cast %64 : vector<1x8x32xf32> to vector<8x32xf32>
    %66 = arith.addf %65, %63 : vector<8x32xf32>
    %c0_30 = arith.constant 0 : index
    %c0_31 = arith.constant 0 : index
    %c0_32 = arith.constant 0 : index
    %67 = vector.load %arg9[%c0_30, %c0_31, %c0_32] : memref<1x16x32xf32, #tpu.memory_space<vmem>>, vector<1x8x32xf32>
    %68 = vector.shape_cast %67 : vector<1x8x32xf32> to vector<8x32xf32>
    %69 = vector.shape_cast %66 : vector<8x32xf32> to vector<1x8x32xf32>
    tpu.vector_store %arg9[%c0_30, %c0_31, %c0_32], %69 {strides = array<i32>} : memref<1x16x32xf32, #tpu.memory_space<vmem>>, vector<1x8x32xf32>,
    %70 = vector.extract_strided_slice %41 {offsets = [16, 0], sizes = [8, 128], strides = [1, 1]} : vector<32x128xbf16> to vector<8x128xbf16>
    %71 = vector.extract_strided_slice %41 {offsets = [24, 0], sizes = [8, 128], strides = [1, 1]} : vector<32x128xbf16> to vector<8x128xbf16>
    %72 = vector.extract_strided_slice %53 {offsets = [4, 0], sizes = [4, 128], strides = [1, 1]} : vector<8x128xbf16> to vector<4x128xbf16>
    %73 = vector.shape_cast %72 : vector<4x128xbf16> to vector<4x1x128xbf16>
    %74 = vector.shape_cast %71 : vector<8x128xbf16> to vector<1x8x128xbf16>
    %75 = vector.broadcast %73 : vector<4x1x128xbf16> to vector<4x8x128xbf16>
    %76 = vector.broadcast %74 : vector<1x8x128xbf16> to vector<4x8x128xbf16>
    %77 = arith.mulf %75, %76 : vector<4x8x128xbf16>
    %78 = vector.shape_cast %77 : vector<4x8x128xbf16> to vector<32x128xbf16>
    %cst_33 = arith.constant dense<0.000000e+00> : vector<8x32xf32>
    %79 = tpu.matmul %70, %78, %cst_33 {dimension_numbers = #tpu.dot_dimension_numbers<[1], [1], [0], [0], [0, 0, 1, 0], [], []>} : vector<8x128xbf16>, vector<32x128xbf16>, vector<8x32xf32> -> vector<8x32xf32>
    %c0_34 = arith.constant 0 : index
    %c8 = arith.constant 8 : index
    %c0_35 = arith.constant 0 : index
    %80 = vector.load %arg9[%c0_34, %c8, %c0_35] : memref<1x16x32xf32, #tpu.memory_space<vmem>>, vector<1x8x32xf32>
    %81 = vector.shape_cast %80 : vector<1x8x32xf32> to vector<8x32xf32>
    %82 = arith.addf %81, %79 : vector<8x32xf32>
    %c0_36 = arith.constant 0 : index
    %c8_37 = arith.constant 8 : index
    %c0_38 = arith.constant 0 : index
    %83 = vector.load %arg9[%c0_36, %c8_37, %c0_38] : memref<1x16x32xf32, #tpu.memory_space<vmem>>, vector<1x8x32xf32>
    %84 = vector.shape_cast %83 : vector<1x8x32xf32> to vector<8x32xf32>
    %85 = vector.shape_cast %82 : vector<8x32xf32> to vector<1x8x32xf32>
    tpu.vector_store %arg9[%c0_36, %c8_37, %c0_38], %85 {strides = array<i32>} : memref<1x16x32xf32, #tpu.memory_space<vmem>>, vector<1x8x32xf32>,
    return
  }
  func.func @transform_0(%arg0: i32, %arg1: i32) -> (i32, i32, i32) {
    %c0_i32 = arith.constant 0 : i32
    %c0_i32_0 = arith.constant 0 : i32
    return %arg0, %c0_i32, %arg1 : i32, i32, i32
  }
  func.func @transform_1(%arg0: i32, %arg1: i32) -> (i32, i32) {
    %c0_i32 = arith.constant 0 : i32
    %c0_i32_0 = arith.constant 0 : i32
    %c0_i32_1 = arith.constant 0 : i32
    return %c0_i32, %c0_i32_0 : i32, i32
  }
  func.func @transform_2(%arg0: i32, %arg1: i32) -> (i32, i32) {
    %c0_i32 = arith.constant 0 : i32
    %c0_i32_0 = arith.constant 0 : i32
    %c0_i32_1 = arith.constant 0 : i32
    return %c0_i32, %c0_i32_0 : i32, i32
  }
  func.func @transform_3(%arg0: i32, %arg1: i32) -> (i32, i32) {
    %c0_i32 = arith.constant 0 : i32
    %c0_i32_0 = arith.constant 0 : i32
    %c0_i32_1 = arith.constant 0 : i32
    return %c0_i32, %c0_i32_0 : i32, i32
  }
  func.func @transform_4(%arg0: i32, %arg1: i32) -> (i32, i32) {
    %c0_i32 = arith.constant 0 : i32
    %c0_i32_0 = arith.constant 0 : i32
    %c0_i32_1 = arith.constant 0 : i32
    return %c0_i32, %c0_i32_0 : i32, i32
  }
  func.func @transform_5(%arg0: i32, %arg1: i32) -> (i32, i32) {
    %c0_i32 = arith.constant 0 : i32
    %c0_i32_0 = arith.constant 0 : i32
    %c0_i32_1 = arith.constant 0 : i32
    return %c0_i32, %c0_i32_0 : i32, i32
  }
  func.func @transform_6(%arg0: i32, %arg1: i32) -> (i32, i32, i32) {
    %c0_i32 = arith.constant 0 : i32
    %c0_i32_0 = arith.constant 0 : i32
    return %arg0, %c0_i32, %arg1 : i32, i32, i32
  }
  func.func @transform_7(%arg0: i32, %arg1: i32) -> (i32, i32, i32) {
    %c0_i32 = arith.constant 0 : i32
    %c0_i32_0 = arith.constant 0 : i32
    %c0_i32_1 = arith.constant 0 : i32
    return %arg0, %c0_i32, %c0_i32_0 : i32, i32, i32
  }
  func.func @transform_8(%arg0: i32, %arg1: i32) -> (i32, i32, i32) {
    %c0_i32 = arith.constant 0 : i32
    %c0_i32_0 = arith.constant 0 : i32
    return %arg0, %c0_i32, %arg1 : i32, i32, i32
  }
}

</mosaic_0001>

<llo_original>
// kernel: tpu_custom_call.1
$region0: #{tpu_custom_call.1}
  #allocation0 [shape = 'u32[]', space=smem, size = 0x4, offset = 0x4, fixed_abs, tag = 'smem constant byte address 0x4 - core index']
  #allocation1 [shape = 'u32[144,128]{1,0:T(1,128)}', space=vmem, size = 0x12000, scoped, tag = 'internal scratch']
  %s0 = inlined_call_operand.vmem [shape: bf16[2,32,128], index: 0, kind: input, shape index: {}]
  %s1 = inlined_call_operand.hbm [shape: bf16[14,32], index: 1, kind: input, shape index: {}]
  %s2 = inlined_call_operand.vmem [shape: f32[14,1], index: 2, kind: input, shape index: {}]
  %s3 = inlined_call_operand.vmem [shape: f32[4,6], index: 3, kind: input, shape index: {}]
  %s4 = inlined_call_operand.hbm [shape: f32[4,3], index: 4, kind: input, shape index: {}]
  %s5 = inlined_call_operand.vmem [shape: f32[4,1], index: 5, kind: input, shape index: {}]
  %s6 = inlined_call_operand.vmem [shape: f32[2,3,128], index: 6, kind: input, shape index: {}]
  %s7 = inlined_call_operand.hbm [shape: f32[2,16,32], index: 7, kind: output, shape index: {0}]
  %s8 = inlined_call_operand.hbm [shape: f32[2,4,128], index: 8, kind: output, shape index: {1}]
  %9 = xla_tuple %s7, %s8
  %s10 = sld [smem:[#allocation0]]
  $region81: #{tpu_custom_call.1} parent=0
    _
  %s12 = ssub.s32 1, %s10
  %s13 = scalar_select 0, %s12, %s10
  $region1: #{tpu_custom_call.1} parent=0
    #allocation2 [shape = 'u8[4096]{0}', space=vmem, size = 0x1000, scoped, tag = 'input window, operand 1, single buffered']
    #allocation3 [shape = 's32[2]{0}', space=sflag, size = 0x8, scoped, tag = 'scoped memory for tpu_custom_call.1']
    #allocation4 [shape = 's32[2]{0}', space=sflag, size = 0x8, scoped, tag = 'scoped memory for tpu_custom_call.1']
    #allocation5 [shape = 'u8[2048]{0}', space=vmem, size = 0x800, scoped, tag = 'input window, operand 4, single buffered']
    #allocation6 [shape = 's32[1]{0}', space=sflag, size = 0x4, scoped, tag = 'scoped memory for tpu_custom_call.1']
    #allocation7 [shape = 'u8[16384]{0}', space=vmem, size = 0x4000, scoped, tag = 'output window, operand 0']
    #allocation8 [shape = 'u8[4096]{0}', space=vmem, size = 0x1000, scoped, tag = 'output window, operand 1']
    #allocation9 [shape = 's32[2]{0}', space=sflag, size = 0x8, scoped, tag = 'scoped memory for tpu_custom_call.1']
    %14 = vsyncpa [#allocation3], 0
    %15 = vsyncpa [#allocation6], 0
    %16 = vsyncpa [#allocation4], 0
    %s17 = scalar_lea.sflag [#allocation4], 1
    %18 = vsyncpa %s17, 0
    %19 = vsyncpa [#allocation9], 0
    %s20 = scalar_lea.sflag [#allocation9], 1
    %21 = vsyncpa %s20, 0
    loop: start=0, step=1, limit=4
    $region2: #{tpu_custom_call.1} parent=1 // loop_pre_header
      _
    $region3: #{tpu_custom_call.1} parent=1 // loop_header
      %s23 = sphi 0, %s27
      %p24 = scmp.ge.s32.totalorder %s23, 4
      %s30 = sphi 0, %s42
      %s31 = sphi 0, %s38
      %s32 = sphi 0, %s30
      %s33 = sphi 0, %s31
      %s34 = sphi 0, %s32
      %s35 = sphi 0, %s33
      %s47 = sphi 0, %s49
      %s50 = sphi 0, %s47
      %s51 = sphi 0, %s50
      %s67 = sphi 0, %s51
      %s71 = sphi 0, %s71
      %s73 = sphi 0, %s71
      %s74 = sphi 0, %s73
      %s88 = sphi 0, %s74
      %s92 = sphi 0, %s92
      %s94 = sphi 0, %s92
      %s95 = sphi 0, %s94
      %s109 = sphi 0, %s95
      %s113 = sphi 0, %s113
      %s115 = sphi 0, %s113
      %s116 = sphi 0, %s115
      %s130 = sphi 0, %s116
      %s134 = sphi 0, %s134
      %s136 = sphi 0, %s134
      %s137 = sphi 0, %s136
      %s151 = sphi 0, %s137
      %s155 = sphi 0, %s155
      %s157 = sphi 0, %s155
      %s158 = sphi 0, %s157
      %s172 = sphi 0, %s158
      %s180 = sphi 0, %s182
      %s183 = sphi 0, %s180
      %s184 = sphi 0, %s183
      %s200 = sphi 0, %s184
      %s206 = sphi 0, %s208
      %s209 = sphi 0, %s206
      %s210 = sphi 0, %s209
      %s226 = sphi 0, %s210
      %s234 = sphi 0, %s236
      %s237 = sphi 0, %s234
      %s238 = sphi 0, %s237
      %s254 = sphi 0, %s238
    $region4: #{tpu_custom_call.1} parent=1 // loop_header_branch
      %26 = sbr.rel (%p24) target = $region8
    $region5: #{tpu_custom_call.1} parent=1 // loop_body
      %s28 = ssub.s32 %s23, 1
      %s29 = ssub.s32 %s23, 2
      %s36 = sadd.s32 1, %s31
      %p37 = scmp.ge.s32.totalorder %s36, 1
      %s38 = scalar_select %p37, 0, %s36
      %s39 = sadd.s32 1, %s30
      %s40 = scalar_select %p37, %s39, %s30
      %p41 = scmp.ge.s32.totalorder %s40, 2
      %s42 = scalar_select %p41, 0, %s40
      %s43 = ssub.s32 %s30, %s42
      %s44 = ssub.s32 %s31, %s38
      %s45 = sor.u32 %s43, %s44
      %p46 = scmp.eq.s32.totalorder %s45, 0
      %s48 = sadd.s32 %s47, 1
      %s49 = scalar_select %p46, %s47, %s48
      %p52 = pneg %p46
      %p53 = scmp.eq.s32.totalorder %s23, 1
      %p54 = por %p52, %p53
      %p55 = scmp.ne.s32.totalorder %s47, %s50
      %p56 = scmp.eq.s32.totalorder %s23, 0
      %p57 = por %p55, %p56
      %p58 = scmp.ne.s32.totalorder %s47, %s50
      %p59 = scmp.eq.s32.totalorder %s28, 1
      %p60 = por %p58, %p59
      %p61 = scmp.ne.s32.totalorder %s50, %s51
      %p62 = scmp.eq.s32.totalorder %s28, 0
      %p63 = por %p61, %p62
      %p64 = scmp.ne.s32.totalorder %s50, %s51
      %p65 = scmp.eq.s32.totalorder %s29, 1
      %p66 = por %p64, %p65
      %p68 = scmp.ne.s32.totalorder %s51, %s67
      %p69 = scmp.eq.s32.totalorder %s29, 0
      %p70 = por %p68, %p69
      %s72 = sadd.s32 %s71, 1
      %p75 = scmp.eq.s32.totalorder %s23, 1
      %p76 = scmp.ne.s32.totalorder %s71, %s73
      %p77 = scmp.eq.s32.totalorder %s23, 0
      %p78 = por %p76, %p77
      %p79 = scmp.ne.s32.totalorder %s71, %s73
      %p80 = scmp.eq.s32.totalorder %s28, 1
      %p81 = por %p79, %p80
      %p82 = scmp.ne.s32.totalorder %s73, %s74
      %p83 = scmp.eq.s32.totalorder %s28, 0
      %p84 = por %p82, %p83
      %p85 = scmp.ne.s32.totalorder %s73, %s74
      %p86 = scmp.eq.s32.totalorder %s29, 1
      %p87 = por %p85, %p86
      %p89 = scmp.ne.s32.totalorder %s74, %s88
      %p90 = scmp.eq.s32.totalorder %s29, 0
      %p91 = por %p89, %p90
      %s93 = sadd.s32 %s92, 1
      %p96 = scmp.eq.s32.totalorder %s23, 1
      %p97 = scmp.ne.s32.totalorder %s92, %s94
      %p98 = scmp.eq.s32.totalorder %s23, 0
      %p99 = por %p97, %p98
      %p100 = scmp.ne.s32.totalorder %s92, %s94
      %p101 = scmp.eq.s32.totalorder %s28, 1
      %p102 = por %p100, %p101
      %p103 = scmp.ne.s32.totalorder %s94, %s95
      %p104 = scmp.eq.s32.totalorder %s28, 0
      %p105 = por %p103, %p104
      %p106 = scmp.ne.s32.totalorder %s94, %s95
      %p107 = scmp.eq.s32.totalorder %s29, 1
      %p108 = por %p106, %p107
      %p110 = scmp.ne.s32.totalorder %s95, %s109
      %p111 = scmp.eq.s32.totalorder %s29, 0
      %p112 = por %p110, %p111
      %s114 = sadd.s32 %s113, 1
      %p117 = scmp.eq.s32.totalorder %s23, 1
      %p118 = scmp.ne.s32.totalorder %s113, %s115
      %p119 = scmp.eq.s32.totalorder %s23, 0
      %p120 = por %p118, %p119
      %p121 = scmp.ne.s32.totalorder %s113, %s115
      %p122 = scmp.eq.s32.totalorder %s28, 1
      %p123 = por %p121, %p122
      %p124 = scmp.ne.s32.totalorder %s115, %s116
      %p125 = scmp.eq.s32.totalorder %s28, 0
      %p126 = por %p124, %p125
      %p127 = scmp.ne.s32.totalorder %s115, %s116
      %p128 = scmp.eq.s32.totalorder %s29, 1
      %p129 = por %p127, %p128
      %p131 = scmp.ne.s32.totalorder %s116, %s130
      %p132 = scmp.eq.s32.totalorder %s29, 0
      %p133 = por %p131, %p132
      %s135 = sadd.s32 %s134, 1
      %p138 = scmp.eq.s32.totalorder %s23, 1
      %p139 = scmp.ne.s32.totalorder %s134, %s136
      %p140 = scmp.eq.s32.totalorder %s23, 0
      %p141 = por %p139, %p140
      %p142 = scmp.ne.s32.totalorder %s134, %s136
      %p143 = scmp.eq.s32.totalorder %s28, 1
      %p144 = por %p142, %p143
      %p145 = scmp.ne.s32.totalorder %s136, %s137
      %p146 = scmp.eq.s32.totalorder %s28, 0
      %p147 = por %p145, %p146
      %p148 = scmp.ne.s32.totalorder %s136, %s137
      %p149 = scmp.eq.s32.totalorder %s29, 1
      %p150 = por %p148, %p149
      %p152 = scmp.ne.s32.totalorder %s137, %s151
      %p153 = scmp.eq.s32.totalorder %s29, 0
      %p154 = por %p152, %p153
      %s156 = sadd.s32 %s155, 1
      %p159 = scmp.eq.s32.totalorder %s23, 1
      %p160 = scmp.ne.s32.totalorder %s155, %s157
      %p161 = scmp.eq.s32.totalorder %s23, 0
      %p162 = por %p160, %p161
      %p163 = scmp.ne.s32.totalorder %s155, %s157
      %p164 = scmp.eq.s32.totalorder %s28, 1
      %p165 = por %p163, %p164
      %p166 = scmp.ne.s32.totalorder %s157, %s158
      %p167 = scmp.eq.s32.totalorder %s28, 0
      %p168 = por %p166, %p167
      %p169 = scmp.ne.s32.totalorder %s157, %s158
      %p170 = scmp.eq.s32.totalorder %s29, 1
      %p171 = por %p169, %p170
      %p173 = scmp.ne.s32.totalorder %s158, %s172
      %p174 = scmp.eq.s32.totalorder %s29, 0
      %p175 = por %p173, %p174
      %s176 = ssub.s32 %s30, %s42
      %s177 = ssub.s32 %s31, %s38
      %s178 = sor.u32 %s176, %s177
      %p179 = scmp.eq.s32.totalorder %s178, 0
      %s181 = sadd.s32 %s180, 1
      %s182 = scalar_select %p179, %s180, %s181
      %p185 = pneg %p179
      %p186 = scmp.eq.s32.totalorder %s23, 1
      %p187 = por %p185, %p186
      %p188 = scmp.ne.s32.totalorder %s180, %s183
      %p189 = scmp.eq.s32.totalorder %s23, 0
      %p190 = por %p188, %p189
      %p191 = scmp.ne.s32.totalorder %s180, %s183
      %p192 = scmp.eq.s32.totalorder %s28, 1
      %p193 = por %p191, %p192
      %p194 = scmp.ne.s32.totalorder %s183, %s184
      %p195 = scmp.eq.s32.totalorder %s28, 0
      %p196 = por %p194, %p195
      %p197 = scmp.ne.s32.totalorder %s183, %s184
      %p198 = scmp.eq.s32.totalorder %s29, 1
      %p199 = por %p197, %p198
      %p201 = scmp.ne.s32.totalorder %s184, %s200
      %p202 = scmp.eq.s32.totalorder %s29, 0
      %p203 = por %p201, %p202
      %s204 = ssub.s32 %s30, %s42
      %p205 = scmp.eq.s32.totalorder %s204, 0
      %s207 = sadd.s32 %s206, 1
      %s208 = scalar_select %p205, %s206, %s207
      %p211 = pneg %p205
      %p212 = scmp.eq.s32.totalorder %s23, 1
      %p213 = por %p211, %p212
      %p214 = scmp.ne.s32.totalorder %s206, %s209
      %p215 = scmp.eq.s32.totalorder %s23, 0
      %p216 = por %p214, %p215
      %p217 = scmp.ne.s32.totalorder %s206, %s209
      %p218 = scmp.eq.s32.totalorder %s28, 1
      %p219 = por %p217, %p218
      %p220 = scmp.ne.s32.totalorder %s209, %s210
      %p221 = scmp.eq.s32.totalorder %s28, 0
      %p222 = por %p220, %p221
      %p223 = scmp.ne.s32.totalorder %s209, %s210
      %p224 = scmp.eq.s32.totalorder %s29, 1
      %p225 = por %p223, %p224
      %p227 = scmp.ne.s32.totalorder %s210, %s226
      %p228 = scmp.eq.s32.totalorder %s29, 0
      %p229 = por %p227, %p228
      %s230 = ssub.s32 %s30, %s42
      %s231 = ssub.s32 %s31, %s38
      %s232 = sor.u32 %s230, %s231
      %p233 = scmp.eq.s32.totalorder %s232, 0
      %s235 = sadd.s32 %s234, 1
      %s236 = scalar_select %p233, %s234, %s235
      %p239 = pneg %p233
      %p240 = scmp.eq.s32.totalorder %s23, 1
      %p241 = por %p239, %p240
      %p242 = scmp.ne.s32.totalorder %s234, %s237
      %p243 = scmp.eq.s32.totalorder %s23, 0
      %p244 = por %p242, %p243
      %p245 = scmp.ne.s32.totalorder %s234, %s237
      %p246 = scmp.eq.s32.totalorder %s28, 1
      %p247 = por %p245, %p246
      %p248 = scmp.ne.s32.totalorder %s237, %s238
      %p249 = scmp.eq.s32.totalorder %s28, 0
      %p250 = por %p248, %p249
      %p251 = scmp.ne.s32.totalorder %s237, %s238
      %p252 = scmp.eq.s32.totalorder %s29, 1
      %p253 = por %p251, %p252
      %p255 = scmp.ne.s32.totalorder %s238, %s254
      %p256 = scmp.eq.s32.totalorder %s29, 0
      %p257 = por %p255, %p256
      %p258 = scmp.le.s32.totalorder 1, %s23
      %p259 = scmp.lt.s32.totalorder %s23, 3
      %p260 = pnand %p258, %p259
      %p261 = pneg %p260
      // Predicated region
      $region9: #{tpu_custom_call.1} parent=5 // pred_check
        _
      $region10: #{tpu_custom_call.1} parent=5 // pred_check_branch
        %263 = sbr.rel (%p260) target = $region12
      $region11: #{tpu_custom_call.1} parent=5 // pred_region
        %s264 = ssub.s32 %s23, 1
        // Predicated region
        $region13: #{tpu_custom_call.1} parent=11 // pred_check
          %p265 = pneg %p84
        $region14: #{tpu_custom_call.1} parent=11 // pred_check_branch
          %267 = sbr.rel (%p265) target = $region16
        $region15: #{tpu_custom_call.1} parent=11 // pred_region
          %s269 = ssub.s32 128, 128
          %270 = vsyncadd [#allocation3], %s269
          %s271 = sshll.u32 [#allocation2], 4
          %s272 = int_to_ptr.vmem [resolvable:$true] %s271
          %277 = dma.hbm_to_vmem [thread:$0]  %s1, 128, %s272, [#allocation3], 64, 64, 4
        $region16: #{tpu_custom_call.1} parent=11 // pred_fallthru
          _
        // Predicated region
        $region17: #{tpu_custom_call.1} parent=11 // pred_check
          %p278 = pneg %p105
        $region18: #{tpu_custom_call.1} parent=11 // pred_check_branch
          %280 = sbr.rel (%p278) target = $region20
        $region19: #{tpu_custom_call.1} parent=11 // pred_region
          _
        $region20: #{tpu_custom_call.1} parent=11 // pred_fallthru
          _
        // Predicated region
        $region21: #{tpu_custom_call.1} parent=11 // pred_check
          %p281 = pneg %p126
        $region22: #{tpu_custom_call.1} parent=11 // pred_check_branch
          %283 = sbr.rel (%p281) target = $region24
        $region23: #{tpu_custom_call.1} parent=11 // pred_region
          _
        $region24: #{tpu_custom_call.1} parent=11 // pred_fallthru
          _
        // Predicated region
        $region25: #{tpu_custom_call.1} parent=11 // pred_check
          %p284 = pneg %p147
        $region26: #{tpu_custom_call.1} parent=11 // pred_check_branch
          %286 = sbr.rel (%p284) target = $region28
        $region27: #{tpu_custom_call.1} parent=11 // pred_region
          %s288 = ssub.s32 64, 64
          %289 = vsyncadd [#allocation6], %s288
          %s291 = sshll.u32 [#allocation5], 4
          %s292 = int_to_ptr.vmem [resolvable:$true] %s291
          %294 = dma.hbm_to_vmem [thread:$0]  %s4, 64, %s292, [#allocation6]
        $region28: #{tpu_custom_call.1} parent=11 // pred_fallthru
          _
        // Predicated region
        $region29: #{tpu_custom_call.1} parent=11 // pred_check
          %p295 = pneg %p168
        $region30: #{tpu_custom_call.1} parent=11 // pred_check_branch
          %297 = sbr.rel (%p295) target = $region32
        $region31: #{tpu_custom_call.1} parent=11 // pred_region
          _
        $region32: #{tpu_custom_call.1} parent=11 // pred_fallthru
          _
      $region12: #{tpu_custom_call.1} parent=5 // pred_fallthru
        _
      %p298 = scmp.lt.s32.totalorder %s23, 2
      // Predicated region
      $region33: #{tpu_custom_call.1} parent=5 // pred_check
        %p299 = pneg %p298
      $region34: #{tpu_custom_call.1} parent=5 // pred_check_branch
        %301 = sbr.rel (%p299) target = $region36
      $region35: #{tpu_custom_call.1} parent=5 // pred_region
        // Predicated region
        $region37: #{tpu_custom_call.1} parent=35 // pred_check
          %p302 = pneg %p57
        $region38: #{tpu_custom_call.1} parent=35 // pred_check_branch
          %304 = sbr.rel (%p302) target = $region40
        $region39: #{tpu_custom_call.1} parent=35 // pred_region
          %p305 = scmp.lt.s32.totalorder %s30, 1
          %s306 = scalar_select %p305, %s30, 1
          %p307 = scmp.lt.s32.totalorder %s31, 0
          %s308 = scalar_select %p307, %s31, 0
          %s309 = smul.addr %s306, 4
          %s310 = sadd.s32 %s308, %s309
          %s311 = smul.addr %s310, 4
          %s312 = scalar_lea.vmem %s0, %s311
        $region40: #{tpu_custom_call.1} parent=35 // pred_fallthru
          _
        // Predicated region
        $region41: #{tpu_custom_call.1} parent=35 // pred_check
          %p313 = pneg %p190
        $region42: #{tpu_custom_call.1} parent=35 // pred_check_branch
          %315 = sbr.rel (%p313) target = $region44
        $region43: #{tpu_custom_call.1} parent=35 // pred_region
          %p316 = scmp.lt.s32.totalorder %s30, 1
          %s317 = scalar_select %p316, %s30, 1
          %p318 = scmp.lt.s32.totalorder %s31, 0
          %s319 = scalar_select %p318, %s31, 0
          %s320 = sadd.s32 %s319, %s317
          %s321 = smul.addr %s320, 4
          %s322 = scalar_lea.vmem %s6, %s321
        $region44: #{tpu_custom_call.1} parent=35 // pred_fallthru
          _
      $region36: #{tpu_custom_call.1} parent=5 // pred_fallthru
        _
      %p323 = scmp.le.s32.totalorder 1, %s23
      %p324 = scmp.lt.s32.totalorder %s23, 3
      %p325 = pnand %p323, %p324
      %p326 = pneg %p325
      // Predicated region
      $region45: #{tpu_custom_call.1} parent=5 // pred_check
        _
      $region46: #{tpu_custom_call.1} parent=5 // pred_check_branch
        %328 = sbr.rel (%p325) target = $region48
      $region47: #{tpu_custom_call.1} parent=5 // pred_region
        %s329 = ssub.s32 %s23, 1
        // Predicated region
        $region49: #{tpu_custom_call.1} parent=47 // pred_check
          %p330 = pneg %p84
        $region50: #{tpu_custom_call.1} parent=47 // pred_check_branch
          %332 = sbr.rel (%p330) target = $region52
        $region51: #{tpu_custom_call.1} parent=47 // pred_region
          %333 = dma.done [#allocation3], 128
        $region52: #{tpu_custom_call.1} parent=47 // pred_fallthru
          _
        // Predicated region
        $region53: #{tpu_custom_call.1} parent=47 // pred_check
          %p334 = pneg %p147
        $region54: #{tpu_custom_call.1} parent=47 // pred_check_branch
          %336 = sbr.rel (%p334) target = $region56
        $region55: #{tpu_custom_call.1} parent=47 // pred_region
          %337 = dma.done [#allocation6], 64
        $region56: #{tpu_custom_call.1} parent=47 // pred_fallthru
          _
        %p338 = scmp.lt.s32.totalorder %s32, 1
        %s339 = scalar_select %p338, %s32, 1
        %p340 = scmp.lt.s32.totalorder %s33, 0
        %s341 = scalar_select %p340, %s33, 0
        %s342 = smul.addr %s339, 4
        %s343 = sadd.s32 %s341, %s342
        %s344 = smul.addr %s343, 4
        %s345 = scalar_lea.vmem %s0, %s344
        %p346 = pneg %p63
        %p347 = pneg %p60
        %p348 = pneg %p84
        %p349 = pneg %p81
        %p350 = pneg %p105
        %p351 = pneg %p102
        %p352 = pneg %p126
        %p353 = pneg %p123
        %p354 = pneg %p147
        %p355 = pneg %p144
        %p356 = pneg %p168
        %p357 = pneg %p165
        %p358 = scmp.lt.s32.totalorder %s32, 1
        %s359 = scalar_select %p358, %s32, 1
        %p360 = scmp.lt.s32.totalorder %s33, 0
        %s361 = scalar_select %p360, %s33, 0
        %s362 = sadd.s32 %s361, %s359
        %s363 = smul.addr %s362, 4
        %s364 = scalar_lea.vmem %s6, %s363
        %p365 = pneg %p196
        %p366 = pneg %p193
        %p367 = pneg %p222
        %p368 = pneg %p219
        %s369 = sand.u32 %s209, 1
        %s370 = scalar_lea.sflag [#allocation4], %s369
        %s371 = sand.u32 %s209, 1
        %s372 = smul.addr %s371, 16
        %s373 = scalar_lea.vmem [#allocation7], %s372
        %p374 = pneg %p250
        %p375 = pneg %p247
        %s376 = sand.u32 %s237, 1
        %s377 = scalar_lea.sflag [#allocation9], %s376
        %s378 = sand.u32 %s237, 1
        %s379 = smul.addr %s378, 4
        %s380 = scalar_lea.vmem [#allocation8], %s379
        %p381 = scmp.lt.s32.totalorder %s32, 1
        %s382 = scalar_select %p381, %s32, 1
        %p383 = scmp.lt.s32.totalorder %s33, 0
        %s384 = scalar_select %p383, %s33, 0
        %s385 = smul.addr %s382, 4
        %s386 = sadd.s32 %s384, %s385
        %s387 = smul.addr %s386, 4
        %s388 = scalar_lea.vmem %s0, %s387
        %p389 = scmp.lt.s32.totalorder %s32, 1
        %s390 = scalar_select %p389, %s32, 1
        %p391 = scmp.lt.s32.totalorder %s33, 0
        %s392 = scalar_select %p391, %s33, 0
        %s393 = sadd.s32 %s392, %s390
        %s394 = smul.addr %s393, 4
        %s395 = scalar_lea.vmem %s6, %s394
        %p397 = scmp.eq.s32.totalorder %s33, 0
        // Predicated region
        $region57: #{tpu_custom_call.1} parent=47 // pred_check
          %p398 = pneg %p397
        $region58: #{tpu_custom_call.1} parent=47 // pred_check_branch
          %400 = sbr.rel (%p398) target = $region60
        $region59: #{tpu_custom_call.1} parent=47 // pred_region
          %vm401 = vcmask 261120
          %402 = vst.msk [vmem:[%s373] sm:$0xff] %vm401, 0.0
          %403 = vst.msk [vmem:[%s373 + $0x8] sm:$0xff] %vm401, 0.0
        $region60: #{tpu_custom_call.1} parent=47 // pred_fallthru
          _
        %v404 = vld [vmem:[#allocation2] sm:$0xf]
        %v405 = vld [vmem:[#allocation2 + $0x4] sm:$0x7]
        %v406 = vld [vmem:[%s388] sm:$0xf]
        %v407 = vld [vmem:[%s388 + $0x4] sm:$0xf]
        %v408 = vld [vmem:[%s388 + $0x8] sm:$0xf]
        %v409 = vld [vmem:[%s388 + $0xc] sm:$0xf]
        %v410 = vld [vmem:[%s2] sm:$0xff]
        %v411 = vld [vmem:[%s2 + $0x8] sm:$0x3f]
        %413 = vset.pattern.permute.xlu0 0
        %414 = vperm.xlu0 %413, %v410
        %v415 = vpop.permute.xlu0 %414
        %418 = vset.pattern.permute.xlu0 0
        %419 = vperm.xlu0 %418, %v411
        %v420 = vpop.permute.xlu0 %419
        %v424 = vunpack.c.l.b16 %v404
        %v425 = vunpack.c.l.b16 %v405
        %v426 = vpack.c.b16 %v425, %v424
        %v431 = vunpack.c.l.b16 %v406
        %v432 = vunpack.c.l.b16 %v407
        %v433 = vunpack.c.l.b16 %v408
        %v434 = vunpack.c.l.b16 %v409
        %v435 = vpack.c.b16 %v432, %v431
        %v436 = vpack.c.b16 %v434, %v433
        %vm439 = vcmask 261120
        %v441 = vsel %vm439, %v426, 0
        %443 = vmatprep.subr.bf16.mxu0 0
        %444 = vmatpush1.bf16.msra.mxu0 0
        %445 = vmatprep.subr.bf16.mxu0 0
        %446 = vmatpush1.bf16.msra.mxu0 0
        %447 = vmatprep.subr.bf16.mxu0 0
        %448 = vmatpush1.bf16.msra.mxu0 0
        %449 = vmatprep.subr.bf16.mxu0 0
        %450 = vmatpush1.bf16.msra.mxu0 0
        %451 = vmatprep.subr.bf16.mxu0 0
        %452 = vmatpush1.bf16.msra.mxu0 0
        %453 = vmatprep.subr.bf16.mxu0 0
        %454 = vmatpush1.bf16.msra.mxu0 0
        %455 = vmatprep.subr.bf16.mxu0 0
        %456 = vmatpush1.bf16.msra.mxu0 %v436
        %457 = vmatprep.subr.bf16.mxu0 0
        %458 = vmatpush1.bf16.msra.mxu0 %v435
        %459 = vmatprep.subr.bf16.mxu0 0
        %460 = vmatpush2.bf16.msra.mxu0 0
        %461 = vmatprep.subr.bf16.mxu0 0
        %462 = vmatpush2.bf16.msra.mxu0 0
        %463 = vmatprep.subr.bf16.mxu0 0
        %464 = vmatpush2.bf16.msra.mxu0 0
        %465 = vmatprep.subr.bf16.mxu0 0
        %466 = vmatpush2.bf16.msra.mxu0 0
        %467 = vmatprep.subr.bf16.mxu0 0
        %468 = vmatpush2.bf16.msra.mxu0 0
        %469 = vmatprep.subr.bf16.mxu0 0
        %470 = vmatpush2.bf16.msra.mxu0 0
        %471 = vmatprep.subr.bf16.mxu0 0
        %472 = vmatpush2.bf16.msra.mxu0 0
        %473 = vmatprep.subr.bf16.mxu0 0
        %474 = vmatpush2.bf16.msra.mxu0 0
        %475 = vmatprep.mubr.bf16.mxu0 0
        %476 = vmatmul.mubr.bf16.gmra.mxu0 %v441
        %v477 = vpop.f32.mrf.mxu0
        %v478 = vadd.f32 %v415, %v477
        %v479 = vpop.f32.mrf.mxu0
        %v480 = vpop.f32.mrf.mxu0
        %v481 = vadd.f32 %v420, %v480
        %v482 = vpop.f32.mrf.mxu0
        %483 = vdwg.mxu0
        %v484 = vld [vmem:[%s3] sm:$0xf]
        %v485 = vld [vmem:[#allocation5] sm:$0xf]
        %v486 = vld [vmem:[%s395] sm:$0x7]
        %vm487 = vcmask 23552
        %v489 = vsel %vm487, %v485, 0
        %vm491 = vcmask 1042432
        %v493 = vsel %vm491, %v486, 0
        %495 = vmatprep.subr.mxu0 0.0
        %496 = vmatpush1.msra.mxu0 0.0
        %497 = vmatprep.subr.mxu0 0.0
        %498 = vmatpush1.msra.mxu0 0.0
        %499 = vmatprep.subr.mxu0 0.0
        %500 = vmatpush1.msra.mxu0 0.0
        %501 = vmatprep.subr.mxu0 0.0
        %502 = vmatpush1.msra.mxu0 0.0
        %503 = vmatprep.subr.mxu0 0.0
        %504 = vmatpush1.msra.mxu0 0.0
        %505 = vmatprep.subr.mxu0 0.0
        %506 = vmatpush1.msra.mxu0 0.0
        %507 = vmatprep.subr.mxu0 0.0
        %508 = vmatpush1.msra.mxu0 0.0
        %509 = vmatprep.subr.mxu0 0.0
        %510 = vmatpush1.msra.mxu0 0.0
        %511 = vmatprep.subr.mxu0 0.0
        %512 = vmatpush1.msra.mxu0 0.0
        %513 = vmatprep.subr.mxu0 0.0
        %514 = vmatpush1.msra.mxu0 0.0
        %515 = vmatprep.subr.mxu0 0.0
        %516 = vmatpush1.msra.mxu0 0.0
        %517 = vmatprep.subr.mxu0 0.0
        %518 = vmatpush1.msra.mxu0 0.0
        %519 = vmatprep.subr.mxu0 0.0
        %520 = vmatpush1.msra.mxu0 0.0
        %521 = vmatprep.subr.mxu0 0.0
        %522 = vmatpush1.msra.mxu0 0.0
        %523 = vmatprep.subr.mxu0 0.0
        %524 = vmatpush1.msra.mxu0 0.0
        %525 = vmatprep.subr.mxu0 0.0
        %526 = vmatpush1.msra.mxu0 %v493
        %527 = vmatprep.subr.mxu0 0.0
        %528 = vmatpush2.msra.mxu0 0.0
        %529 = vmatprep.subr.mxu0 0.0
        %530 = vmatpush2.msra.mxu0 0.0
        %531 = vmatprep.subr.mxu0 0.0
        %532 = vmatpush2.msra.mxu0 0.0
        %533 = vmatprep.subr.mxu0 0.0
        %534 = vmatpush2.msra.mxu0 0.0
        %535 = vmatprep.subr.mxu0 0.0
        %536 = vmatpush2.msra.mxu0 0.0
        %537 = vmatprep.subr.mxu0 0.0
        %538 = vmatpush2.msra.mxu0 0.0
        %539 = vmatprep.subr.mxu0 0.0
        %540 = vmatpush2.msra.mxu0 0.0
        %541 = vmatprep.subr.mxu0 0.0
        %542 = vmatpush2.msra.mxu0 0.0
        %543 = vmatprep.subr.mxu0 0.0
        %544 = vmatpush2.msra.mxu0 0.0
        %545 = vmatprep.subr.mxu0 0.0
        %546 = vmatpush2.msra.mxu0 0.0
        %547 = vmatprep.subr.mxu0 0.0
        %548 = vmatpush2.msra.mxu0 0.0
        %549 = vmatprep.subr.mxu0 0.0
        %550 = vmatpush2.msra.mxu0 0.0
        %551 = vmatprep.subr.mxu0 0.0
        %552 = vmatpush2.msra.mxu0 0.0
        %553 = vmatprep.subr.mxu0 0.0
        %554 = vmatpush2.msra.mxu0 0.0
        %555 = vmatprep.subr.mxu0 0.0
        %556 = vmatpush2.msra.mxu0 0.0
        %557 = vmatprep.subr.mxu0 0.0
        %558 = vmatpush2.msra.mxu0 0.0
        %559 = vmatprep.mubr.f32.mxu0 0.0
        %560 = vmatmul.mubr.f32.gmra.mxu0 %v489
        %v561 = vpop.f32.mrf.mxu0
        %v562 = vadd.f32 0.0, %v561
        %v563 = vpop.f32.mrf.mxu0
        %564 = vdwg.mxu0
        %vm565 = vcmask 48128
        %v567 = vsel %vm565, %v484, 0
        %vm569 = vcmask 1045504
        %v571 = vsel %vm569, %v478, 0
        %573 = vmatprep.subr.mxu0 0.0
        %574 = vmatpush1.msra.mxu0 0.0
        %575 = vmatprep.subr.mxu0 0.0
        %576 = vmatpush1.msra.mxu0 0.0
        %577 = vmatprep.subr.mxu0 0.0
        %578 = vmatpush1.msra.mxu0 0.0
        %579 = vmatprep.subr.mxu0 0.0
        %580 = vmatpush1.msra.mxu0 0.0
        %581 = vmatprep.subr.mxu0 0.0
        %582 = vmatpush1.msra.mxu0 0.0
        %583 = vmatprep.subr.mxu0 0.0
        %584 = vmatpush1.msra.mxu0 0.0
        %585 = vmatprep.subr.mxu0 0.0
        %586 = vmatpush1.msra.mxu0 0.0
        %587 = vmatprep.subr.mxu0 0.0
        %588 = vmatpush1.msra.mxu0 0.0
        %589 = vmatprep.subr.mxu0 0.0
        %590 = vmatpush1.msra.mxu0 0.0
        %591 = vmatprep.subr.mxu0 0.0
        %592 = vmatpush1.msra.mxu0 0.0
        %593 = vmatprep.subr.mxu0 0.0
        %594 = vmatpush1.msra.mxu0 0.0
        %595 = vmatprep.subr.mxu0 0.0
        %596 = vmatpush1.msra.mxu0 0.0
        %597 = vmatprep.subr.mxu0 0.0
        %598 = vmatpush1.msra.mxu0 0.0
        %599 = vmatprep.subr.mxu0 0.0
        %600 = vmatpush1.msra.mxu0 0.0
        %601 = vmatprep.subr.mxu0 0.0
        %602 = vmatpush1.msra.mxu0 0.0
        %603 = vmatprep.subr.mxu0 0.0
        %604 = vmatpush1.msra.mxu0 %v571
        %605 = vmatprep.subr.mxu0 0.0
        %606 = vmatpush2.msra.mxu0 0.0
        %607 = vmatprep.subr.mxu0 0.0
        %608 = vmatpush2.msra.mxu0 0.0
        %609 = vmatprep.subr.mxu0 0.0
        %610 = vmatpush2.msra.mxu0 0.0
        %611 = vmatprep.subr.mxu0 0.0
        %612 = vmatpush2.msra.mxu0 0.0
        %613 = vmatprep.subr.mxu0 0.0
        %614 = vmatpush2.msra.mxu0 0.0
        %615 = vmatprep.subr.mxu0 0.0
        %616 = vmatpush2.msra.mxu0 0.0
        %617 = vmatprep.subr.mxu0 0.0
        %618 = vmatpush2.msra.mxu0 0.0
        %619 = vmatprep.subr.mxu0 0.0
        %620 = vmatpush2.msra.mxu0 0.0
        %621 = vmatprep.subr.mxu0 0.0
        %622 = vmatpush2.msra.mxu0 0.0
        %623 = vmatprep.subr.mxu0 0.0
        %624 = vmatpush2.msra.mxu0 0.0
        %625 = vmatprep.subr.mxu0 0.0
        %626 = vmatpush2.msra.mxu0 0.0
        %627 = vmatprep.subr.mxu0 0.0
        %628 = vmatpush2.msra.mxu0 0.0
        %629 = vmatprep.subr.mxu0 0.0
        %630 = vmatpush2.msra.mxu0 0.0
        %631 = vmatprep.subr.mxu0 0.0
        %632 = vmatpush2.msra.mxu0 0.0
        %633 = vmatprep.subr.mxu0 0.0
        %634 = vmatpush2.msra.mxu0 0.0
        %635 = vmatprep.subr.mxu0 0.0
        %636 = vmatpush2.msra.mxu0 0.0
        %637 = vmatprep.mubr.f32.mxu0 0.0
        %638 = vmatmul.mubr.f32.gmra.mxu0 %v567
        %v639 = vpop.f32.mrf.mxu0
        %v640 = vadd.f32 %v562, %v639
        %v641 = vpop.f32.mrf.mxu0
        %642 = vdwg.mxu0
        %v643 = vld [vmem:[%s5] sm:$0xf]
        %645 = vset.pattern.permute.xlu0 0
        %646 = vperm.xlu0 %645, %v643
        %v647 = vpop.permute.xlu0 %646
        %v649 = vadd.f32 %v640, %v647
        %650 = vst [vmem:[%s380] sm:$0xf] %v649
        %v651 = vtanh.pop %v649
        %v652 = vadd.f32 %v651, 1.0
        %v653 = vmul.f32 %v652, 3.5
        %v654 = vlaneseq
        %v655 = vshrl.u32 %v654, 7
        %v656 = vcvt.s32.f32 %v655
        %v659 = vunpack.c.l.s4 1966171168
        %v660 = vunpack.c.0.s8 %v659
        %v661 = vlaneseq
        %v662 = vshrl.u32 %v661, 7
        %v663 = vsub.s32 %v660, %v662
        %v664 = vrot.slane %v653, %v663
        %v665 = vcombine.high %v664, %v664
        %v667 = vunpack.c.l.s4 1966171168
        %v668 = vunpack.c.0.s8 %v667
        %v669 = vlaneseq
        %v670 = vshrl.u32 %v669, 7
        %v671 = vsub.s32 %v668, %v670
        %v672 = vrot.slane %v664, %v671
        %v674 = vunpack.c.l.s4 1966171168
        %v675 = vunpack.c.0.s8 %v674
        %v676 = vlaneseq
        %v677 = vshrl.u32 %v676, 7
        %v678 = vsub.s32 %v675, %v677
        %v679 = vrot.slane %v665, %v678
        %v680 = vcombine.high %v672, %v672
        %v681 = vcombine.high %v679, %v679
        %v682 = vlaneseq
        %v683 = vshrl.u32 %v682, 7
        %v684 = vsub.s32 0, %v683
        %v685 = vrot.slane %v672, %v684
        %v686 = vlaneseq
        %v687 = vshrl.u32 %v686, 7
        %v688 = vsub.s32 0, %v687
        %v689 = vrot.slane %v679, %v688
        %v690 = vlaneseq
        %v691 = vshrl.u32 %v690, 7
        %v692 = vsub.s32 0, %v691
        %v693 = vrot.slane %v680, %v692
        %v694 = vlaneseq
        %v695 = vshrl.u32 %v694, 7
        %v696 = vsub.s32 0, %v695
        %v697 = vrot.slane %v681, %v696
        %v702 = vsub.f32 %v656, %v685
        %v703 = vsub.f32 %v656, %v689
        %v704 = vsub.f32 %v656, %v693
        %v705 = vsub.f32 %v656, %v697
        %v706 = vand.u32 2147483647, %v702
        %v707 = vand.u32 2147483647, %v703
        %v708 = vand.u32 2147483647, %v704
        %v709 = vand.u32 2147483647, %v705
        %v710 = vsub.f32 1.0, %v706
        %v711 = vsub.f32 1.0, %v707
        %v712 = vsub.f32 1.0, %v708
        %v713 = vsub.f32 1.0, %v709
        %v714 = vmax.f32 %v710, 0.0
        %v715 = vmax.f32 %v711, 0.0
        %v716 = vmax.f32 %v712, 0.0
        %v717 = vmax.f32 %v713, 0.0
        %v718 = vpack.c.bf16 %v715, %v714
        %v719 = vpack.c.bf16 %v717, %v716
        %s720 = smul.u32 %s33, 128
        %v721 = vlaneseq
        %v722 = vand.u32 %v721, 127
        %v723 = vstv %s720
        %v724 = vadd.s32 %v723, %v722
        %vm725 = vcmp.lt.s32.totalorder %v724, 16
        %v726 = vsel %vm725, 1, 0
        %vm727 = vcmp.eq.s32.totalorder %v726, 1
        %v728 = vsel %vm727, %v478, 0.0
        %v729 = vsel %vm727, %v481, 0.0
        %v730 = vpack.c.bf16 %v729, %v728
        %v732 = vcombine.high %v730, %v730
        %v734 = vunpack.c.l.s4 1966171168
        %v735 = vunpack.c.0.s8 %v734
        %v736 = vlaneseq
        %v737 = vshrl.u32 %v736, 7
        %v738 = vsub.s32 %v735, %v737
        %v739 = vrot.slane %v730, %v738
        %v741 = vunpack.c.l.s4 1966171168
        %v742 = vunpack.c.0.s8 %v741
        %v743 = vlaneseq
        %v744 = vshrl.u32 %v743, 7
        %v745 = vsub.s32 %v742, %v744
        %v746 = vrot.slane %v732, %v745
        %v747 = vcombine.high %v739, %v739
        %v749 = vunpack.c.l.s4 1966171168
        %v750 = vunpack.c.0.s8 %v749
        %v751 = vlaneseq
        %v752 = vshrl.u32 %v751, 7
        %v753 = vsub.s32 %v750, %v752
        %v754 = vrot.slane %v746, %v753
        %v756 = vunpack.c.l.s4 1966171168
        %v757 = vunpack.c.0.s8 %v756
        %v758 = vlaneseq
        %v759 = vshrl.u32 %v758, 7
        %v760 = vsub.s32 %v757, %v759
        %v761 = vrot.slane %v747, %v760
        %v762 = vcombine.high %v761, %v761
        %v763 = vunpack.i.l.s16 %v762
        %v764 = vunpack.i.h.s16 %v762
        %v765 = vunpack.i.l.s16 %v754
        %v766 = vunpack.i.h.s16 %v754
        %v767 = vpack.i.b16 %v763, %v763
        %v768 = vpack.i.b16 %v764, %v764
        %v769 = vpack.i.b16 %v765, %v765
        %v770 = vpack.i.b16 %v766, %v766
        %v771 = vlaneseq
        %v772 = vshrl.u32 %v771, 7
        %v773 = vsub.s32 0, %v772
        %v774 = vrot.slane %v767, %v773
        %v775 = vlaneseq
        %v776 = vshrl.u32 %v775, 7
        %v777 = vsub.s32 0, %v776
        %v778 = vrot.slane %v768, %v777
        %v779 = vlaneseq
        %v780 = vshrl.u32 %v779, 7
        %v781 = vsub.s32 0, %v780
        %v782 = vrot.slane %v769, %v781
        %v783 = vlaneseq
        %v784 = vshrl.u32 %v783, 7
        %v785 = vsub.s32 0, %v784
        %v786 = vrot.slane %v770, %v785
        %v788 = vpack.i.b16 %v774, %v774
        %v790 = vlaneseq
        %v791 = vshrl.u32 %v790, 7
        %v792 = vsub.s32 0, %v791
        %v793 = vrot.slane %v788, %v792
        %v795 = vpack.i.b16 %v778, %v778
        %v797 = vlaneseq
        %v798 = vshrl.u32 %v797, 7
        %v799 = vsub.s32 0, %v798
        %v800 = vrot.slane %v795, %v799
        %v802 = vpack.i.b16 %v782, %v782
        %v804 = vlaneseq
        %v805 = vshrl.u32 %v804, 7
        %v806 = vsub.s32 0, %v805
        %v807 = vrot.slane %v802, %v806
        %v809 = vpack.i.b16 %v786, %v786
        %v811 = vlaneseq
        %v812 = vshrl.u32 %v811, 7
        %v813 = vsub.s32 0, %v812
        %v814 = vrot.slane %v809, %v813
        %v815 = vmul.bf16 %v793, %v718
        %v816 = vmul.bf16 %v800, %v718
        %v817 = vmul.bf16 %v807, %v718
        %v818 = vmul.bf16 %v814, %v718
        %v823 = vunpack.c.h.b16 %v815
        %v824 = vunpack.c.h.b16 %v816
        %v825 = vunpack.c.h.b16 %v817
        %v826 = vunpack.c.h.b16 %v818
        %v827 = vpack.c.b16 %v824, %v823
        %v828 = vpack.c.b16 %v826, %v825
        %831 = vmatprep.subr.bf16.mxu0 0
        %832 = vmatpush1.bf16.xpose.msra.mxu0 0
        %833 = vmatprep.subr.bf16.mxu0 0
        %834 = vmatpush1.bf16.xpose.msra.mxu0 0
        %835 = vmatprep.subr.bf16.mxu0 0
        %836 = vmatpush1.bf16.xpose.msra.mxu0 0
        %837 = vmatprep.subr.bf16.mxu0 0
        %838 = vmatpush1.bf16.xpose.msra.mxu0 0
        %839 = vmatprep.subr.bf16.mxu0 0
        %840 = vmatpush1.bf16.xpose.msra.mxu0 0
        %841 = vmatprep.subr.bf16.mxu0 0
        %842 = vmatpush1.bf16.xpose.msra.mxu0 0
        %843 = vmatprep.subr.bf16.mxu0 0
        %844 = vmatpush1.bf16.xpose.msra.mxu0 %v828
        %845 = vmatprep.subr.bf16.mxu0 0
        %846 = vmatpush1.bf16.xpose.msra.mxu0 %v827
        %847 = vmatprep.subr.bf16.mxu0 0
        %848 = vmatpush2.bf16.xpose.msra.mxu0 0
        %849 = vmatprep.subr.bf16.mxu0 0
        %850 = vmatpush2.bf16.xpose.msra.mxu0 0
        %851 = vmatprep.subr.bf16.mxu0 0
        %852 = vmatpush2.bf16.xpose.msra.mxu0 0
        %853 = vmatprep.subr.bf16.mxu0 0
        %854 = vmatpush2.bf16.xpose.msra.mxu0 0
        %855 = vmatprep.subr.bf16.mxu0 0
        %856 = vmatpush2.bf16.xpose.msra.mxu0 0
        %857 = vmatprep.subr.bf16.mxu0 0
        %858 = vmatpush2.bf16.xpose.msra.mxu0 0
        %859 = vmatprep.subr.bf16.mxu0 0
        %860 = vmatpush2.bf16.xpose.msra.mxu0 0
        %861 = vmatprep.subr.bf16.mxu0 0
        %862 = vmatpush2.bf16.xpose.msra.mxu0 0
        %863 = vmatprep.mubr.bf16.mxu0 0
        %864 = vmatmul.mubr.bf16.gmra.mxu0 %v718
        %v865 = vpop.f32.mrf.mxu0
        %v866 = vadd.f32 0.0, %v865
        %v867 = vpop.f32.mrf.mxu0
        %v868 = vpop.f32.mrf.mxu0
        %v869 = vpop.f32.mrf.mxu0
        %870 = vdwg.mxu0
        %v871 = vld [vmem:[%s373] sm:$0xff]
        %v872 = vadd.f32 %v871, %v866
        %873 = vst.msk [vmem:[%s373] sm:$0xff] %vm439, %v872
        %v874 = vcombine.high %v746, %v746
        %v876 = vunpack.c.l.s4 1966171168
        %v877 = vunpack.c.0.s8 %v876
        %v878 = vlaneseq
        %v879 = vshrl.u32 %v878, 7
        %v880 = vsub.s32 %v877, %v879
        %v881 = vrot.slane %v874, %v880
        %v882 = vcombine.high %v754, %v754
        %v883 = vunpack.i.l.s16 %v881
        %v884 = vunpack.i.h.s16 %v881
        %v885 = vunpack.i.l.s16 %v882
        %v886 = vunpack.i.h.s16 %v882
        %v887 = vpack.i.b16 %v883, %v883
        %v888 = vpack.i.b16 %v884, %v884
        %v889 = vpack.i.b16 %v885, %v885
        %v890 = vpack.i.b16 %v886, %v886
        %v891 = vlaneseq
        %v892 = vshrl.u32 %v891, 7
        %v893 = vsub.s32 0, %v892
        %v894 = vrot.slane %v887, %v893
        %v895 = vlaneseq
        %v896 = vshrl.u32 %v895, 7
        %v897 = vsub.s32 0, %v896
        %v898 = vrot.slane %v888, %v897
        %v899 = vlaneseq
        %v900 = vshrl.u32 %v899, 7
        %v901 = vsub.s32 0, %v900
        %v902 = vrot.slane %v889, %v901
        %v903 = vlaneseq
        %v904 = vshrl.u32 %v903, 7
        %v905 = vsub.s32 0, %v904
        %v906 = vrot.slane %v890, %v905
        %v908 = vpack.i.b16 %v894, %v894
        %v910 = vlaneseq
        %v911 = vshrl.u32 %v910, 7
        %v912 = vsub.s32 0, %v911
        %v913 = vrot.slane %v908, %v912
        %v915 = vpack.i.b16 %v898, %v898
        %v917 = vlaneseq
        %v918 = vshrl.u32 %v917, 7
        %v919 = vsub.s32 0, %v918
        %v920 = vrot.slane %v915, %v919
        %v922 = vpack.i.b16 %v902, %v902
        %v924 = vlaneseq
        %v925 = vshrl.u32 %v924, 7
        %v926 = vsub.s32 0, %v925
        %v927 = vrot.slane %v922, %v926
        %v929 = vpack.i.b16 %v906, %v906
        %v931 = vlaneseq
        %v932 = vshrl.u32 %v931, 7
        %v933 = vsub.s32 0, %v932
        %v934 = vrot.slane %v929, %v933
        %v935 = vmul.bf16 %v913, %v719
        %v936 = vmul.bf16 %v920, %v719
        %v937 = vmul.bf16 %v927, %v719
        %v938 = vmul.bf16 %v934, %v719
        %v943 = vunpack.c.h.b16 %v935
        %v944 = vunpack.c.h.b16 %v936
        %v945 = vunpack.c.h.b16 %v937
        %v946 = vunpack.c.h.b16 %v938
        %v947 = vpack.c.b16 %v944, %v943
        %v948 = vpack.c.b16 %v946, %v945
        %951 = vmatprep.subr.bf16.mxu0 0
        %952 = vmatpush1.bf16.xpose.msra.mxu0 0
        %953 = vmatprep.subr.bf16.mxu0 0
        %954 = vmatpush1.bf16.xpose.msra.mxu0 0
        %955 = vmatprep.subr.bf16.mxu0 0
        %956 = vmatpush1.bf16.xpose.msra.mxu0 0
        %957 = vmatprep.subr.bf16.mxu0 0
        %958 = vmatpush1.bf16.xpose.msra.mxu0 0
        %959 = vmatprep.subr.bf16.mxu0 0
        %960 = vmatpush1.bf16.xpose.msra.mxu0 0
        %961 = vmatprep.subr.bf16.mxu0 0
        %962 = vmatpush1.bf16.xpose.msra.mxu0 0
        %963 = vmatprep.subr.bf16.mxu0 0
        %964 = vmatpush1.bf16.xpose.msra.mxu0 %v948
        %965 = vmatprep.subr.bf16.mxu0 0
        %966 = vmatpush1.bf16.xpose.msra.mxu0 %v947
        %967 = vmatprep.subr.bf16.mxu0 0
        %968 = vmatpush2.bf16.xpose.msra.mxu0 0
        %969 = vmatprep.subr.bf16.mxu0 0
        %970 = vmatpush2.bf16.xpose.msra.mxu0 0
        %971 = vmatprep.subr.bf16.mxu0 0
        %972 = vmatpush2.bf16.xpose.msra.mxu0 0
        %973 = vmatprep.subr.bf16.mxu0 0
        %974 = vmatpush2.bf16.xpose.msra.mxu0 0
        %975 = vmatprep.subr.bf16.mxu0 0
        %976 = vmatpush2.bf16.xpose.msra.mxu0 0
        %977 = vmatprep.subr.bf16.mxu0 0
        %978 = vmatpush2.bf16.xpose.msra.mxu0 0
        %979 = vmatprep.subr.bf16.mxu0 0
        %980 = vmatpush2.bf16.xpose.msra.mxu0 0
        %981 = vmatprep.subr.bf16.mxu0 0
        %982 = vmatpush2.bf16.xpose.msra.mxu0 0
        %983 = vmatprep.mubr.bf16.mxu0 0
        %984 = vmatmul.mubr.bf16.gmra.mxu0 %v719
        %v985 = vpop.f32.mrf.mxu0
        %v986 = vadd.f32 0.0, %v985
        %v987 = vpop.f32.mrf.mxu0
        %v988 = vpop.f32.mrf.mxu0
        %v989 = vpop.f32.mrf.mxu0
        %990 = vdwg.mxu0
        %v991 = vld [vmem:[%s373 + $0x8] sm:$0xff]
        %v992 = vadd.f32 %v991, %v986
        %993 = vst.msk [vmem:[%s373 + $0x8] sm:$0xff] %vm439, %v992
        %s994 = sand.u32 %s209, 1
        %s995 = scalar_lea.sflag [#allocation4], %s994
        %s996 = sand.u32 %s209, 1
        %s997 = smul.addr %s996, 16
        %s998 = scalar_lea.vmem [#allocation7], %s997
        %s999 = sand.u32 %s237, 1
        %s1000 = scalar_lea.sflag [#allocation9], %s999
        %s1001 = sand.u32 %s237, 1
        %s1002 = smul.addr %s1001, 4
        %s1003 = scalar_lea.vmem [#allocation8], %s1002
        // Predicated region
        $region61: #{tpu_custom_call.1} parent=47 // pred_check
          %p1004 = pneg %p219
        $region62: #{tpu_custom_call.1} parent=47 // pred_check_branch
          %1006 = sbr.rel (%p1004) target = $region64
        $region63: #{tpu_custom_call.1} parent=47 // pred_region
          %s1008 = ssub.s32 256, 256
          %1009 = vsyncadd %s995, %s1008
          %s1010 = smul.addr %s32, 2
          %s1011 = smul.addr %s1010, 128
          %s1012 = scalar_lea.hbm %s7, %s1011
          %s1013 = sshll.u32 %s998, 4
          %s1014 = int_to_ptr.vmem [resolvable:$true] %s1013
          %1019 = dma.vmem_to_hbm [thread:$0]  %s1014, 256, %s1012, %s995, 128, 128, 8
        $region64: #{tpu_custom_call.1} parent=47 // pred_fallthru
          _
        // Predicated region
        $region65: #{tpu_custom_call.1} parent=47 // pred_check
          %p1020 = pneg %p247
        $region66: #{tpu_custom_call.1} parent=47 // pred_check_branch
          %1022 = sbr.rel (%p1020) target = $region68
        $region67: #{tpu_custom_call.1} parent=47 // pred_region
          %s1024 = ssub.s32 64, 64
          %1025 = vsyncadd %s1000, %s1024
          %s1026 = sadd.s32 %s33, %s32
          %s1027 = smul.addr %s1026, 64
          %s1028 = scalar_lea.hbm %s8, %s1027
          %s1030 = sshll.u32 %s1003, 4
          %s1031 = int_to_ptr.vmem [resolvable:$true] %s1030
          %1033 = dma.vmem_to_hbm [thread:$0]  %s1031, 64, %s1028, %s1000
        $region68: #{tpu_custom_call.1} parent=47 // pred_fallthru
          _
      $region48: #{tpu_custom_call.1} parent=5 // pred_fallthru
        _
      %p1034 = scmp.le.s32.totalorder 2, %s23
      // Predicated region
      $region69: #{tpu_custom_call.1} parent=5 // pred_check
        %p1035 = pneg %p1034
      $region70: #{tpu_custom_call.1} parent=5 // pred_check_branch
        %1037 = sbr.rel (%p1035) target = $region72
      $region71: #{tpu_custom_call.1} parent=5 // pred_region
        %s1038 = ssub.s32 %s23, 2
        // Predicated region
        $region73: #{tpu_custom_call.1} parent=71 // pred_check
          %p1039 = pneg %p225
        $region74: #{tpu_custom_call.1} parent=71 // pred_check_branch
          %1041 = sbr.rel (%p1039) target = $region76
        $region75: #{tpu_custom_call.1} parent=71 // pred_region
          %s1042 = sand.u32 %s210, 1
          %s1043 = scalar_lea.sflag [#allocation4], %s1042
          %s1044 = sand.u32 %s210, 1
          %s1045 = smul.addr %s1044, 16
          %s1046 = scalar_lea.vmem [#allocation7], %s1045
          %1047 = dma.done %s1043, 256
        $region76: #{tpu_custom_call.1} parent=71 // pred_fallthru
          _
        // Predicated region
        $region77: #{tpu_custom_call.1} parent=71 // pred_check
          %p1048 = pneg %p253
        $region78: #{tpu_custom_call.1} parent=71 // pred_check_branch
          %1050 = sbr.rel (%p1048) target = $region80
        $region79: #{tpu_custom_call.1} parent=71 // pred_region
          %s1051 = sand.u32 %s238, 1
          %s1052 = scalar_lea.sflag [#allocation9], %s1051
          %s1053 = sand.u32 %s238, 1
          %s1054 = smul.addr %s1053, 4
          %s1055 = scalar_lea.vmem [#allocation8], %s1054
          %1056 = dma.done %s1052, 64
        $region80: #{tpu_custom_call.1} parent=71 // pred_fallthru
          _
      $region72: #{tpu_custom_call.1} parent=5 // pred_fallthru
        _
    $region6: #{tpu_custom_call.1} parent=1 // loop_footer
      %s27 = sadd.s32 1, %s23
    $region7: #{tpu_custom_call.1} parent=1 // loop_footer_branch
      %22 = sbr.rel target = $region3
    $region8: #{tpu_custom_call.1} parent=1 // loop_exit
      _
    %1057 = vsyncpa [#allocation3], 1
    %s1058 = scalar_lea.sflag [#allocation3], 1
    %1059 = vsyncpa %s1058, 1
    %1060 = vsyncpa [#allocation6], 1
    %1061 = vsyncpa [#allocation4], 1
    %s1062 = scalar_lea.sflag [#allocation4], 1
    %1063 = vsyncpa %s1062, 1
    %1064 = vsyncpa [#allocation9], 1
    %s1065 = scalar_lea.sflag [#allocation9], 1
    %1066 = vsyncpa %s1065, 1

</llo_original>
